<compile_context>
chip_gen: v7x
topology: tpu7x:2x2x1
jax: 0.10.0
libtpu: 0.0.40
codegen_flags: <defaults>
</compile_context>

<pallas_src>
import functools

import jax
import jax.numpy as jnp
from jax.experimental import pallas as pl
from jax.experimental.pallas import tpu as pltpu

EPS = 1e-5  # torch.nn.InstanceNorm1d default eps


def _round_up(v, m):
    return (v + m - 1) // m * m


def _cdiv(a, b):
    return (a + b - 1) // b


def _vmem_capacity_bytes():
    try:
        info = pltpu.get_tpu_info()
        cap = getattr(info, "vmem_capacity_bytes", None)
        if cap:
            return int(cap)
    except Exception:
        pass
    return 64 << 20  # conservative (v7x per-TensorCore VMEM)


def _ffadain_kernel(x_ref, xid_ref, xpo_ref, wpo_ref, wid_ref, b_ref, out_ref,
                    *, l_valid, l_pad):
    """One (sample n, L-tile l) grid step.

    x_ref   : (1, C,   Lp)  f32   full (zero-padded) row, resident across l
    xid_ref : (1, Cid, TL)  f32   identity conditioning tile
    xpo_ref : (1, Cpo, TL)  bf16  pose conditioning tile (dominant DMA)
    wpo_ref : (2Cp, Cpo)    bf16  stacked [mu | sigma] pose weights (blended)
    wid_ref : (2Cp, Cid)    f32   stacked [mu | sigma] id weights   (blended)
    b_ref   : (2Cp, 1)      f32   stacked blended bias
    out_ref : (1, C,   TL)  f32
    """
    f32 = jnp.float32

    xid = xid_ref[0]                     # (Cid, TL)
    xpo = xpo_ref[0]                     # (Cpo, TL) bf16

    C   = out_ref.shape[1]
    TL  = out_ref.shape[2]
    Cid = xid.shape[0]
    Cp  = wpo_ref.shape[0] // 2          # stacked rows: [mu block | sigma block]

    # --- pose projection: one stacked (mu; sigma) bf16 matmul, f32 acc -----
    proj = jnp.dot(wpo_ref[...], xpo, preferred_element_type=f32)   # (2Cp, TL)

    # --- identity projection (K = Cid = 3): fused broadcast FMAs on the VPU
    wid = wid_ref[...]                                              # (2Cp, Cid)
    id_acc = wid[:, 0:1] * xid[0:1, :]
    for k in range(1, Cid):
        id_acc = id_acc + wid[:, k:k + 1] * xid[k:k + 1, :]
    proj = proj + b_ref[...] + id_acc

    miu   = proj[:C, :]                  # (C, TL)
    sigma = proj[Cp:Cp + C, :]           # (C, TL)  (Cp is a multiple of 8)

    # --- InstanceNorm1d stats over the full valid row (two-pass, f32) ------
    x_row  = x_ref.at[0]                 # Ref view (C, Lp) -- zero cost
    x_full = x_row[...]                  # (C, Lp)
    inv_l = 1.0 / float(l_valid)
    mean = jnp.sum(x_full, axis=-1, keepdims=True) * inv_l
    d    = x_full - mean
    ss   = jnp.sum(d * d, axis=-1, keepdims=True)
    if l_pad:
        # zero-padded lanes contribute (0 - mean)^2 = mean^2 each; remove them.
        ss = ss - float(l_pad) * (mean * mean)
    var  = jnp.maximum(ss * inv_l, 0.0)
    rstd = jax.lax.rsqrt(var + EPS)

    # --- normalize this L-tile and blend ------------------------------------
    start = pl.multiple_of(pl.program_id(1) * TL, 128)
    x_t = x_row[:, pl.ds(start, TL)]     # (C, TL)
    xn  = (x_t - mean) * rstd
    out_ref[0] = (xn * sigma + miu).astype(out_ref.dtype)


def ffadain_pallas(x, x_id, x_po, params):
    (alpha, beta,
     w_id1, b_id1, w_id2, b_id2,
     w_po1, b_po1, w_po2, b_po2) = params

    N, C, L = x.shape
    Cid = x_id.shape[1]
    Cpo = x_po.shape[1]

    a  = alpha.reshape(())[()]           # scalar trace values
    bt = beta.reshape(())[()]

    # --- Fold the alpha/beta blend into the (small) weights, stack mu/sigma -
    #   miu   = beta  * (w_po1 @ x_po + b_po1) + (1-beta)  * (w_id1 @ x_id + b_id1)
    #   sigma = alpha * (w_po2 @ x_po + b_po2) + (1-alpha) * (w_id2 @ x_id + b_id2)
    Cp = _round_up(C, 8)                 # sigma slice starts on a sublane tile

    def pad_rows(w):                     # (C, K) -> (Cp, K), zero rows
        return jnp.pad(w, ((0, Cp - C), (0, 0)))

    w_po = jnp.concatenate([pad_rows(bt * w_po1),
                            pad_rows(a * w_po2)], axis=0)            # (2Cp, Cpo)
    w_id = jnp.concatenate([pad_rows((1.0 - bt) * w_id1),
                            pad_rows((1.0 - a) * w_id2)], axis=0)    # (2Cp, Cid)
    bias = jnp.concatenate([pad_rows(bt * b_po1 + (1.0 - bt) * b_id1),
                            pad_rows(a * b_po2 + (1.0 - a) * b_id2)],
                           axis=0)                                   # (2Cp, 1)
    w_po_b = w_po.astype(jnp.bfloat16)   # pose path in bf16, f32 accumulate

    # --- Generation-aware L tiling (lane-dense, VMEM-fitting) ---------------
    vmem_cap = _vmem_capacity_bytes()
    big_vmem = vmem_cap >= (100 << 20)   # v5e/v6e (128 MiB) vs v7x (64 MiB)
    tl_cap = 8192 if big_vmem else 2048

    Lp128 = _round_up(L, 128)
    num_l = _cdiv(Lp128, tl_cap)
    TL = _round_up(_cdiv(Lp128, num_l), 128)
    Lp = TL * num_l
    pad_l = Lp - L

    if pad_l:
        padL = lambda t: jnp.pad(t, ((0, 0), (0, 0), (0, pad_l)))
        x_p, x_id_p, x_po_p = padL(x), padL(x_id), padL(x_po)
    else:
        x_p, x_id_p, x_po_p = x, x_id, x_po
    x_po_b = x_po_p.astype(jnp.bfloat16)  # >99% of HBM traffic: halve its bytes

    kernel = functools.partial(_ffadain_kernel, l_valid=L, l_pad=pad_l)

    # Advisory cost estimate so XLA can schedule surrounding ops around us.
    flops = (2 * N * Lp * (2 * Cp) * Cpo          # pose matmul
             + 2 * N * Lp * (2 * Cp) * Cid        # identity FMAs
             + 8 * N * C * Lp                     # normalize + blend
             + 3 * N * num_l * C * Lp)            # per-tile stats recompute
    bytes_accessed = (N * Lp * (Cpo * 2 + Cid * 4 + 2 * C * 4)
                      + 2 * Cp * (Cpo * 2 + Cid * 4 + 4))
    cost = pl.CostEstimate(flops=int(flops),
                           transcendentals=int(N * C * num_l),
                           bytes_accessed=int(bytes_accessed))

    def _run(deep_po_buffer):
        xpo_map = lambda n, l: (n, 0, l)
        if deep_po_buffer:
            xpo_spec = pl.BlockSpec((1, Cpo, TL), xpo_map,
                                    pipeline_mode=pl.Buffered(3))
            n_po_buf = 3
        else:
            xpo_spec = pl.BlockSpec((1, Cpo, TL), xpo_map)
            n_po_buf = 2

        grid_spec = pltpu.PrefetchScalarGridSpec(
            num_scalar_prefetch=0,
            grid=(N, num_l),
            in_specs=[
                pl.BlockSpec((1, C, Lp),   lambda n, l: (n, 0, 0)),   # x (full row)
                pl.BlockSpec((1, Cid, TL), lambda n, l: (n, 0, l)),   # x_id tile
                xpo_spec,                                             # x_po tile bf16
                pl.BlockSpec((2 * Cp, Cpo), lambda n, l: (0, 0)),     # stacked pose W
                pl.BlockSpec((2 * Cp, Cid), lambda n, l: (0, 0)),     # stacked id   W
                pl.BlockSpec((2 * Cp, 1),   lambda n, l: (0, 0)),     # stacked bias
            ],
            out_specs=pl.BlockSpec((1, C, TL), lambda n, l: (n, 0, l)),
        )

        # VMEM budget: actual pipelined footprint, capped at 0.8x physical.
        footprint = (Cpo * TL * 2 * n_po_buf        # x_po tiles (bf16)
                     + C * Lp * 4 * 2               # full x rows
                     + Cid * TL * 4 * 2             # x_id tiles
                     + C * TL * 4 * 2               # out tiles
                     + 2 * (2 * Cp) * (Cpo * 2 + Cid * 4 + 4))  # resident weights
        vmem_limit = int(min(max(footprint + (8 << 20), 32 << 20),
                             int(0.8 * vmem_cap)))

        return pl.pallas_call(
            kernel,
            out_shape=jax.ShapeDtypeStruct((N, C, Lp), x.dtype),
            grid_spec=grid_spec,
            compiler_params=pltpu.CompilerParams(
                dimension_semantics=("parallel", "parallel"),
                vmem_limit_bytes=vmem_limit),
            cost_estimate=cost,
        )(x_p, x_id_p, x_po_b, w_po_b, w_id, bias)

    use_deep = big_vmem and num_l > 1 and hasattr(pl, "Buffered")
    if use_deep:
        try:
            out = _run(True)
        except Exception:       # unsupported pipeline_mode on this jax/Mosaic
            out = _run(False)
    else:
        out = _run(False)

    return out[:, :, :L] if pad_l else out


def ffadain_ref(x, x_id, x_po, params):
    """Pure-JAX f32 reference mirroring the PyTorch forward (unblended weights)."""
    (alpha, beta,
     w_id1, b_id1, w_id2, b_id2,
     w_po1, b_po1, w_po2, b_po2) = params

    hp = jax.lax.Precision.HIGHEST

    def conv1x1(w, b, inp):  # w: (C, Cin), b: (C, 1), inp: (N, Cin, L)
        return jnp.einsum('ck,nkl->ncl', w, inp, precision=hp) + b[None, :, :]

    miu_id   = conv1x1(w_id1, b_id1, x_id)
    sigma_id = conv1x1(w_id2, b_id2, x_id)
    miu_po   = conv1x1(w_po1, b_po1, x_po)
    sigma_po = conv1x1(w_po2, b_po2, x_po)

    sigma = alpha * sigma_po + (1.0 - alpha) * sigma_id
    miu   = beta  * miu_po   + (1.0 - beta)  * miu_id

    mean = jnp.mean(x, axis=-1, keepdims=True)
    var  = jnp.mean(jnp.square(x - mean), axis=-1, keepdims=True)
    xn   = (x - mean) / jnp.sqrt(var + EPS)
    return xn * sigma + miu


if __name__ == "__main__":
    N, C, L = 2, 4, 16
    C_ID, C_PO = 3, 1027

    key = jax.random.PRNGKey(0)
    ks = jax.random.split(key, 16)

    x    = jax.random.normal(ks[0], (N, C,    L), dtype=jnp.float32)
    x_id = jax.random.normal(ks[1], (N, C_ID, L), dtype=jnp.float32)
    x_po = jax.random.normal(ks[2], (N, C_PO, L), dtype=jnp.float32)

    # Synthetic parameters (conv weights (C, C_in, 1) flattened to (C, C_in),
    # biases (C,) -> (C, 1)).
    w_id1 = 0.1 * jax.random.normal(ks[3], (C, C_ID), dtype=jnp.float32)
    b_id1 = 0.1 * jax.random.normal(ks[4], (C, 1),    dtype=jnp.float32)
    w_id2 = 0.1 * jax.random.normal(ks[5], (C, C_ID), dtype=jnp.float32)
    b_id2 = 0.1 * jax.random.normal(ks[6], (C, 1),    dtype=jnp.float32)
    w_po1 = 0.02 * jax.random.normal(ks[7], (C, C_PO), dtype=jnp.float32)
    b_po1 = 0.1  * jax.random.normal(ks[8], (C, 1),    dtype=jnp.float32)
    w_po2 = 0.02 * jax.random.normal(ks[9], (C, C_PO), dtype=jnp.float32)
    b_po2 = 0.1  * jax.random.normal(ks[10], (C, 1),   dtype=jnp.float32)
    # alpha/beta are nn.Parameter(zeros(1)); use nonzero values so the blend
    # path is exercised (still deterministic).
    alpha = jnp.array([0.25], dtype=jnp.float32)
    beta  = jnp.array([0.60], dtype=jnp.float32)

    params = (alpha, beta,
              w_id1, b_id1, w_id2, b_id2,
              w_po1, b_po1, w_po2, b_po2)

    out = ffadain_pallas(x, x_id, x_po, params)
    out = jax.block_until_ready(out)

    ref = ffadain_ref(x, x_id, x_po, params)
    assert out.shape == (N, C, L)
    # Tolerance accounts for the intentional bf16 pose path (1027-term dot of
    # bf16 operands with f32 accumulation) vs. the HIGHEST-precision reference.
    assert jnp.allclose(out, ref, rtol=2e-2, atol=2e-2), (
        f"max abs err = {jnp.max(jnp.abs(out - ref))}")

    print("KERNEL_OK")
</pallas_src>

<mosaic_0001>
module attributes {stable_mosaic.version = 11 : i64} {
  func.func @_ffadain_kernel(%arg0: i32, %arg1: i32, %arg2: memref<1x4x128xf32, #tpu.memory_space<vmem>>, %arg3: memref<1x3x128xf32, #tpu.memory_space<vmem>>, %arg4: memref<1x1027x128xbf16, #tpu.memory_space<vmem>>, %arg5: memref<16x1027xbf16, #tpu.memory_space<vmem>>, %arg6: memref<16x3xf32, #tpu.memory_space<vmem>>, %arg7: memref<16x1xf32, #tpu.memory_space<vmem>>, %arg8: memref<1x4x128xf32, #tpu.memory_space<vmem>>) attributes {dimension_semantics = [#tpu.dimension_semantics<parallel>, #tpu.dimension_semantics<parallel>], iteration_bounds = array<i64: 2, 1>, scalar_prefetch = 0 : i64, scratch_operands = 0 : i64, tpu.core_type = #tpu.core_type<tc>, window_params = [{transform_indices = @transform_0, window_bounds = array<i64: 1, 4, 128>}, {transform_indices = @transform_1, window_bounds = array<i64: 1, 3, 128>}, {transform_indices = @transform_2, window_bounds = array<i64: 1, 1027, 128>}, {pipeline_mode = #tpu.pipeline_mode<synchronous>, transform_indices = @transform_3, window_bounds = array<i64: 16, 1027>}, {pipeline_mode = #tpu.pipeline_mode<synchronous>, transform_indices = @transform_4, window_bounds = array<i64: 16, 3>}, {pipeline_mode = #tpu.pipeline_mode<synchronous>, transform_indices = @transform_5, window_bounds = array<i64: 16, 1>}, {transform_indices = @transform_6, window_bounds = array<i64: 1, 4, 128>}]} {
    %c0 = arith.constant 0 : index
    %c0_0 = arith.constant 0 : index
    %c0_1 = arith.constant 0 : index
    %0 = vector.load %arg3[%c0, %c0_0, %c0_1] : memref<1x3x128xf32, #tpu.memory_space<vmem>>, vector<1x3x128xf32>
    %1 = vector.shape_cast %0 : vector<1x3x128xf32> to vector<3x128xf32>
    %c0_2 = arith.constant 0 : index
    %c0_3 = arith.constant 0 : index
    %c0_4 = arith.constant 0 : index
    %2 = vector.load %arg4[%c0_2, %c0_3, %c0_4] : memref<1x1027x128xbf16, #tpu.memory_space<vmem>>, vector<1x1027x128xbf16>
    %3 = vector.shape_cast %2 : vector<1x1027x128xbf16> to vector<1027x128xbf16>
    %c0_5 = arith.constant 0 : index
    %c0_6 = arith.constant 0 : index
    %4 = vector.load %arg5[%c0_5, %c0_6] : memref<16x1027xbf16, #tpu.memory_space<vmem>>, vector<16x1027xbf16>
    %cst = arith.constant dense<0.000000e+00> : vector<16x128xf32>
    %5 = tpu.matmul %4, %3, %cst {dimension_numbers = #tpu.dot_dimension_numbers<[1], [0], [0], [1], [0, 0, 1, 1], [], []>} : vector<16x1027xbf16>, vector<1027x128xbf16>, vector<16x128xf32> -> vector<16x128xf32>
    %c0_7 = arith.constant 0 : index
    %c0_8 = arith.constant 0 : index
    %6 = vector.load %arg6[%c0_7, %c0_8] : memref<16x3xf32, #tpu.memory_space<vmem>>, vector<16x3xf32>
    %7 = vector.extract_strided_slice %6 {offsets = [0, 0], sizes = [16, 1], strides = [1, 1]} : vector<16x3xf32> to vector<16x1xf32>
    %8 = vector.extract_strided_slice %1 {offsets = [0, 0], sizes = [1, 128], strides = [1, 1]} : vector<3x128xf32> to vector<1x128xf32>
    %9 = vector.broadcast %7 : vector<16x1xf32> to vector<16x128xf32>
    %10 = vector.broadcast %8 : vector<1x128xf32> to vector<16x128xf32>
    %11 = arith.mulf %9, %10 : vector<16x128xf32>
    %12 = vector.extract_strided_slice %6 {offsets = [0, 1], sizes = [16, 1], strides = [1, 1]} : vector<16x3xf32> to vector<16x1xf32>
    %13 = vector.extract_strided_slice %1 {offsets = [1, 0], sizes = [1, 128], strides = [1, 1]} : vector<3x128xf32> to vector<1x128xf32>
    %14 = vector.broadcast %12 : vector<16x1xf32> to vector<16x128xf32>
    %15 = vector.broadcast %13 : vector<1x128xf32> to vector<16x128xf32>
    %16 = arith.mulf %14, %15 : vector<16x128xf32>
    %17 = arith.addf %11, %16 : vector<16x128xf32>
    %18 = vector.extract_strided_slice %6 {offsets = [0, 2], sizes = [16, 1], strides = [1, 1]} : vector<16x3xf32> to vector<16x1xf32>
    %19 = vector.extract_strided_slice %1 {offsets = [2, 0], sizes = [1, 128], strides = [1, 1]} : vector<3x128xf32> to vector<1x128xf32>
    %20 = vector.broadcast %18 : vector<16x1xf32> to vector<16x128xf32>
    %21 = vector.broadcast %19 : vector<1x128xf32> to vector<16x128xf32>
    %22 = arith.mulf %20, %21 : vector<16x128xf32>
    %23 = arith.addf %17, %22 : vector<16x128xf32>
    %c0_9 = arith.constant 0 : index
    %c0_10 = arith.constant 0 : index
    %24 = vector.load %arg7[%c0_9, %c0_10] : memref<16x1xf32, #tpu.memory_space<vmem>>, vector<16x1xf32>
    %25 = vector.broadcast %24 : vector<16x1xf32> to vector<16x128xf32>
    %26 = arith.addf %5, %25 : vector<16x128xf32>
    %27 = arith.addf %26, %23 : vector<16x128xf32>
    %28 = vector.extract_strided_slice %27 {offsets = [0, 0], sizes = [4, 128], strides = [1, 1]} : vector<16x128xf32> to vector<4x128xf32>
    %29 = vector.extract_strided_slice %27 {offsets = [8, 0], sizes = [4, 128], strides = [1, 1]} : vector<16x128xf32> to vector<4x128xf32>
    %c0_11 = arith.constant 0 : index
    %c0_12 = arith.constant 0 : index
    %c0_13 = arith.constant 0 : index
    %30 = vector.load %arg2[%c0_11, %c0_12, %c0_13] : memref<1x4x128xf32, #tpu.memory_space<vmem>>, vector<1x4x128xf32>
    %31 = vector.shape_cast %30 : vector<1x4x128xf32> to vector<4x128xf32>
    %cst_14 = arith.constant dense<0.000000e+00> : vector<4xf32>
    %32 = vector.multi_reduction <add>, %31, %cst_14 [1] : vector<4x128xf32> to vector<4xf32>
    %33 = vector.shape_cast %32 : vector<4xf32> to vector<4x1xf32>
    %cst_15 = arith.constant 6.250000e-02 : f32
    %34 = vector.broadcast %cst_15 : f32 to vector<4x1xf32>
    %35 = arith.mulf %33, %34 : vector<4x1xf32>
    %36 = vector.broadcast %35 : vector<4x1xf32> to vector<4x128xf32>
    %37 = arith.subf %31, %36 : vector<4x128xf32>
    %38 = arith.mulf %37, %37 : vector<4x128xf32>
    %cst_16 = arith.constant dense<0.000000e+00> : vector<4xf32>
    %39 = vector.multi_reduction <add>, %38, %cst_16 [1] : vector<4x128xf32> to vector<4xf32>
    %40 = vector.shape_cast %39 : vector<4xf32> to vector<4x1xf32>
    %41 = arith.mulf %35, %35 : vector<4x1xf32>
    %cst_17 = arith.constant 1.120000e+02 : f32
    %42 = vector.broadcast %cst_17 : f32 to vector<4x1xf32>
    %43 = arith.mulf %42, %41 : vector<4x1xf32>
    %44 = arith.subf %40, %43 : vector<4x1xf32>
    %cst_18 = arith.constant 6.250000e-02 : f32
    %45 = vector.broadcast %cst_18 : f32 to vector<4x1xf32>
    %46 = arith.mulf %44, %45 : vector<4x1xf32>
    %cst_19 = arith.constant 0.000000e+00 : f32
    %47 = vector.broadcast %cst_19 : f32 to vector<4x1xf32>
    %48 = arith.maximumf %46, %47 : vector<4x1xf32>
    %cst_20 = arith.constant 9.99999974E-6 : f32
    %49 = vector.broadcast %cst_20 : f32 to vector<4x1xf32>
    %50 = arith.addf %48, %49 : vector<4x1xf32>
    %51 = math.rsqrt %50 : vector<4x1xf32>
    %c128_i32 = arith.constant 128 : i32
    %52 = arith.muli %arg1, %c128_i32 : i32
    %53 = tpu.assume_multiple %52, 128 : i32
    %c0_i32 = arith.constant 0 : i32
    %c0_i32_21 = arith.constant 0 : i32
    %c0_i32_22 = arith.constant 0 : i32
    %54 = tpu.memref_slice %arg2[%c0_i32, %c0_i32_21, %c0_i32_22] : memref<1x4x128xf32, #tpu.memory_space<vmem>> -> memref<1x4x128xf32, #tpu.memory_space<vmem>>
    %55 = tpu.memref_squeeze %54 : memref<1x4x128xf32, #tpu.memory_space<vmem>> -> memref<4x128xf32, #tpu.memory_space<vmem>>
    %c0_23 = arith.constant 0 : index
    %56 = arith.index_cast %53 : i32 to index
    %57 = vector.load %55[%c0_23, %56] : memref<4x128xf32, #tpu.memory_space<vmem>>, vector<4x128xf32>
    %58 = vector.broadcast %35 : vector<4x1xf32> to vector<4x128xf32>
    %59 = arith.subf %57, %58 : vector<4x128xf32>
    %60 = vector.broadcast %51 : vector<4x1xf32> to vector<4x128xf32>
    %61 = arith.mulf %59, %60 : vector<4x128xf32>
    %62 = arith.mulf %61, %29 : vector<4x128xf32>
    %63 = arith.addf %62, %28 : vector<4x128xf32>
    %c0_24 = arith.constant 0 : index
    %c0_25 = arith.constant 0 : index
    %c0_26 = arith.constant 0 : index
    %64 = vector.load %arg8[%c0_24, %c0_25, %c0_26] : memref<1x4x128xf32, #tpu.memory_space<vmem>>, vector<1x4x128xf32>
    %65 = vector.shape_cast %64 : vector<1x4x128xf32> to vector<4x128xf32>
    %66 = vector.shape_cast %63 : vector<4x128xf32> to vector<1x4x128xf32>
    tpu.vector_store %arg8[%c0_24, %c0_25, %c0_26], %66 {strides = array<i32>} : memref<1x4x128xf32, #tpu.memory_space<vmem>>, vector<1x4x128xf32>,
    return
  }
  func.func @transform_0(%arg0: i32, %arg1: i32) -> (i32, i32, i32) {
    %c0_i32 = arith.constant 0 : i32
    %c0_i32_0 = arith.constant 0 : i32
    %c0_i32_1 = arith.constant 0 : i32
    return %arg0, %c0_i32, %c0_i32_0 : i32, i32, i32
  }
  func.func @transform_1(%arg0: i32, %arg1: i32) -> (i32, i32, i32) {
    %c0_i32 = arith.constant 0 : i32
    %c0_i32_0 = arith.constant 0 : i32
    return %arg0, %c0_i32, %arg1 : i32, i32, i32
  }
  func.func @transform_2(%arg0: i32, %arg1: i32) -> (i32, i32, i32) {
    %c0_i32 = arith.constant 0 : i32
    %c0_i32_0 = arith.constant 0 : i32
    return %arg0, %c0_i32, %arg1 : i32, i32, i32
  }
  func.func @transform_3(%arg0: i32, %arg1: i32) -> (i32, i32) {
    %c0_i32 = arith.constant 0 : i32
    %c0_i32_0 = arith.constant 0 : i32
    %c0_i32_1 = arith.constant 0 : i32
    return %c0_i32, %c0_i32_0 : i32, i32
  }
  func.func @transform_4(%arg0: i32, %arg1: i32) -> (i32, i32) {
    %c0_i32 = arith.constant 0 : i32
    %c0_i32_0 = arith.constant 0 : i32
    %c0_i32_1 = arith.constant 0 : i32
    return %c0_i32, %c0_i32_0 : i32, i32
  }
  func.func @transform_5(%arg0: i32, %arg1: i32) -> (i32, i32) {
    %c0_i32 = arith.constant 0 : i32
    %c0_i32_0 = arith.constant 0 : i32
    %c0_i32_1 = arith.constant 0 : i32
    return %c0_i32, %c0_i32_0 : i32, i32
  }
  func.func @transform_6(%arg0: i32, %arg1: i32) -> (i32, i32, i32) {
    %c0_i32 = arith.constant 0 : i32
    %c0_i32_0 = arith.constant 0 : i32
    return %arg0, %c0_i32, %arg1 : i32, i32, i32
  }
}

</mosaic_0001>

<llo_original>
// kernel: tpu_custom_call.1
$region0: #{tpu_custom_call.1}
  #allocation0 [shape = 'u32[]', space=smem, size = 0x4, offset = 0x4, fixed_abs, tag = 'smem constant byte address 0x4 - core index']
  #allocation1 [shape = 'u32[144,128]{1,0:T(1,128)}', space=vmem, size = 0x12000, scoped, tag = 'internal scratch']
  %s0 = inlined_call_operand.vmem [shape: f32[2,4,128], index: 0, kind: input, shape index: {}]
  %s1 = inlined_call_operand.vmem [shape: f32[2,3,128], index: 1, kind: input, shape index: {}]
  %s2 = inlined_call_operand.vmem [shape: bf16[2,1027,128], index: 2, kind: input, shape index: {}]
  %s3 = inlined_call_operand.vmem [shape: bf16[16,1027], index: 3, kind: input, shape index: {}]
  %s4 = inlined_call_operand.vmem [shape: f32[16,3], index: 4, kind: input, shape index: {}]
  %s5 = inlined_call_operand.vmem [shape: f32[16,1], index: 5, kind: input, shape index: {}]
  %s6 = inlined_call_operand.hbm [shape: f32[2,4,128], index: 6, kind: output, shape index: {}]
  %s7 = sld [smem:[#allocation0]]
  $region57: #{tpu_custom_call.1} parent=0
    _
  %s9 = ssub.s32 1, %s7
  %s10 = scalar_select 0, %s9, %s7
  $region1: #{tpu_custom_call.1} parent=0
    #allocation2 [shape = 'u8[4096]{0}', space=vmem, size = 0x1000, scoped, tag = 'output window, operand 0']
    #allocation3 [shape = 's32[2]{0}', space=sflag, size = 0x8, scoped, tag = 'scoped memory for tpu_custom_call.1']
    %11 = vsyncpa [#allocation3], 0
    %s12 = scalar_lea.sflag [#allocation3], 1
    %13 = vsyncpa %s12, 0
    loop: start=0, step=1, limit=4
    $region2: #{tpu_custom_call.1} parent=1 // loop_pre_header
      _
    $region3: #{tpu_custom_call.1} parent=1 // loop_header
      %s15 = sphi 0, %s19
      %p16 = scmp.ge.s32.totalorder %s15, 4
      %s22 = sphi 0, %s34
      %s23 = sphi 0, %s30
      %s24 = sphi 0, %s22
      %s25 = sphi 0, %s23
      %s26 = sphi 0, %s24
      %s27 = sphi 0, %s25
      %s37 = sphi 0, %s39
      %s40 = sphi 0, %s37
      %s41 = sphi 0, %s40
      %s57 = sphi 0, %s41
      %s65 = sphi 0, %s67
      %s68 = sphi 0, %s65
      %s69 = sphi 0, %s68
      %s85 = sphi 0, %s69
      %s93 = sphi 0, %s95
      %s96 = sphi 0, %s93
      %s97 = sphi 0, %s96
      %s113 = sphi 0, %s97
      %s117 = sphi 0, %s117
      %s119 = sphi 0, %s117
      %s120 = sphi 0, %s119
      %s134 = sphi 0, %s120
      %s138 = sphi 0, %s138
      %s140 = sphi 0, %s138
      %s141 = sphi 0, %s140
      %s155 = sphi 0, %s141
      %s159 = sphi 0, %s159
      %s161 = sphi 0, %s159
      %s162 = sphi 0, %s161
      %s176 = sphi 0, %s162
      %s184 = sphi 0, %s186
      %s187 = sphi 0, %s184
      %s188 = sphi 0, %s187
      %s204 = sphi 0, %s188
    $region4: #{tpu_custom_call.1} parent=1 // loop_header_branch
      %18 = sbr.rel (%p16) target = $region8
    $region5: #{tpu_custom_call.1} parent=1 // loop_body
      %s20 = ssub.s32 %s15, 1
      %s21 = ssub.s32 %s15, 2
      %s28 = sadd.s32 1, %s23
      %p29 = scmp.ge.s32.totalorder %s28, 1
      %s30 = scalar_select %p29, 0, %s28
      %s31 = sadd.s32 1, %s22
      %s32 = scalar_select %p29, %s31, %s22
      %p33 = scmp.ge.s32.totalorder %s32, 2
      %s34 = scalar_select %p33, 0, %s32
      %s35 = ssub.s32 %s22, %s34
      %p36 = scmp.eq.s32.totalorder %s35, 0
      %s38 = sadd.s32 %s37, 1
      %s39 = scalar_select %p36, %s37, %s38
      %p42 = pneg %p36
      %p43 = scmp.eq.s32.totalorder %s15, 1
      %p44 = por %p42, %p43
      %p45 = scmp.ne.s32.totalorder %s37, %s40
      %p46 = scmp.eq.s32.totalorder %s15, 0
      %p47 = por %p45, %p46
      %p48 = scmp.ne.s32.totalorder %s37, %s40
      %p49 = scmp.eq.s32.totalorder %s20, 1
      %p50 = por %p48, %p49
      %p51 = scmp.ne.s32.totalorder %s40, %s41
      %p52 = scmp.eq.s32.totalorder %s20, 0
      %p53 = por %p51, %p52
      %p54 = scmp.ne.s32.totalorder %s40, %s41
      %p55 = scmp.eq.s32.totalorder %s21, 1
      %p56 = por %p54, %p55
      %p58 = scmp.ne.s32.totalorder %s41, %s57
      %p59 = scmp.eq.s32.totalorder %s21, 0
      %p60 = por %p58, %p59
      %s61 = ssub.s32 %s22, %s34
      %s62 = ssub.s32 %s23, %s30
      %s63 = sor.u32 %s61, %s62
      %p64 = scmp.eq.s32.totalorder %s63, 0
      %s66 = sadd.s32 %s65, 1
      %s67 = scalar_select %p64, %s65, %s66
      %p70 = pneg %p64
      %p71 = scmp.eq.s32.totalorder %s15, 1
      %p72 = por %p70, %p71
      %p73 = scmp.ne.s32.totalorder %s65, %s68
      %p74 = scmp.eq.s32.totalorder %s15, 0
      %p75 = por %p73, %p74
      %p76 = scmp.ne.s32.totalorder %s65, %s68
      %p77 = scmp.eq.s32.totalorder %s20, 1
      %p78 = por %p76, %p77
      %p79 = scmp.ne.s32.totalorder %s68, %s69
      %p80 = scmp.eq.s32.totalorder %s20, 0
      %p81 = por %p79, %p80
      %p82 = scmp.ne.s32.totalorder %s68, %s69
      %p83 = scmp.eq.s32.totalorder %s21, 1
      %p84 = por %p82, %p83
      %p86 = scmp.ne.s32.totalorder %s69, %s85
      %p87 = scmp.eq.s32.totalorder %s21, 0
      %p88 = por %p86, %p87
      %s89 = ssub.s32 %s22, %s34
      %s90 = ssub.s32 %s23, %s30
      %s91 = sor.u32 %s89, %s90
      %p92 = scmp.eq.s32.totalorder %s91, 0
      %s94 = sadd.s32 %s93, 1
      %s95 = scalar_select %p92, %s93, %s94
      %p98 = pneg %p92
      %p99 = scmp.eq.s32.totalorder %s15, 1
      %p100 = por %p98, %p99
      %p101 = scmp.ne.s32.totalorder %s93, %s96
      %p102 = scmp.eq.s32.totalorder %s15, 0
      %p103 = por %p101, %p102
      %p104 = scmp.ne.s32.totalorder %s93, %s96
      %p105 = scmp.eq.s32.totalorder %s20, 1
      %p106 = por %p104, %p105
      %p107 = scmp.ne.s32.totalorder %s96, %s97
      %p108 = scmp.eq.s32.totalorder %s20, 0
      %p109 = por %p107, %p108
      %p110 = scmp.ne.s32.totalorder %s96, %s97
      %p111 = scmp.eq.s32.totalorder %s21, 1
      %p112 = por %p110, %p111
      %p114 = scmp.ne.s32.totalorder %s97, %s113
      %p115 = scmp.eq.s32.totalorder %s21, 0
      %p116 = por %p114, %p115
      %s118 = sadd.s32 %s117, 1
      %p121 = scmp.eq.s32.totalorder %s15, 1
      %p122 = scmp.ne.s32.totalorder %s117, %s119
      %p123 = scmp.eq.s32.totalorder %s15, 0
      %p124 = por %p122, %p123
      %p125 = scmp.ne.s32.totalorder %s117, %s119
      %p126 = scmp.eq.s32.totalorder %s20, 1
      %p127 = por %p125, %p126
      %p128 = scmp.ne.s32.totalorder %s119, %s120
      %p129 = scmp.eq.s32.totalorder %s20, 0
      %p130 = por %p128, %p129
      %p131 = scmp.ne.s32.totalorder %s119, %s120
      %p132 = scmp.eq.s32.totalorder %s21, 1
      %p133 = por %p131, %p132
      %p135 = scmp.ne.s32.totalorder %s120, %s134
      %p136 = scmp.eq.s32.totalorder %s21, 0
      %p137 = por %p135, %p136
      %s139 = sadd.s32 %s138, 1
      %p142 = scmp.eq.s32.totalorder %s15, 1
      %p143 = scmp.ne.s32.totalorder %s138, %s140
      %p144 = scmp.eq.s32.totalorder %s15, 0
      %p145 = por %p143, %p144
      %p146 = scmp.ne.s32.totalorder %s138, %s140
      %p147 = scmp.eq.s32.totalorder %s20, 1
      %p148 = por %p146, %p147
      %p149 = scmp.ne.s32.totalorder %s140, %s141
      %p150 = scmp.eq.s32.totalorder %s20, 0
      %p151 = por %p149, %p150
      %p152 = scmp.ne.s32.totalorder %s140, %s141
      %p153 = scmp.eq.s32.totalorder %s21, 1
      %p154 = por %p152, %p153
      %p156 = scmp.ne.s32.totalorder %s141, %s155
      %p157 = scmp.eq.s32.totalorder %s21, 0
      %p158 = por %p156, %p157
      %s160 = sadd.s32 %s159, 1
      %p163 = scmp.eq.s32.totalorder %s15, 1
      %p164 = scmp.ne.s32.totalorder %s159, %s161
      %p165 = scmp.eq.s32.totalorder %s15, 0
      %p166 = por %p164, %p165
      %p167 = scmp.ne.s32.totalorder %s159, %s161
      %p168 = scmp.eq.s32.totalorder %s20, 1
      %p169 = por %p167, %p168
      %p170 = scmp.ne.s32.totalorder %s161, %s162
      %p171 = scmp.eq.s32.totalorder %s20, 0
      %p172 = por %p170, %p171
      %p173 = scmp.ne.s32.totalorder %s161, %s162
      %p174 = scmp.eq.s32.totalorder %s21, 1
      %p175 = por %p173, %p174
      %p177 = scmp.ne.s32.totalorder %s162, %s176
      %p178 = scmp.eq.s32.totalorder %s21, 0
      %p179 = por %p177, %p178
      %s180 = ssub.s32 %s22, %s34
      %s181 = ssub.s32 %s23, %s30
      %s182 = sor.u32 %s180, %s181
      %p183 = scmp.eq.s32.totalorder %s182, 0
      %s185 = sadd.s32 %s184, 1
      %s186 = scalar_select %p183, %s184, %s185
      %p189 = pneg %p183
      %p190 = scmp.eq.s32.totalorder %s15, 1
      %p191 = por %p189, %p190
      %p192 = scmp.ne.s32.totalorder %s184, %s187
      %p193 = scmp.eq.s32.totalorder %s15, 0
      %p194 = por %p192, %p193
      %p195 = scmp.ne.s32.totalorder %s184, %s187
      %p196 = scmp.eq.s32.totalorder %s20, 1
      %p197 = por %p195, %p196
      %p198 = scmp.ne.s32.totalorder %s187, %s188
      %p199 = scmp.eq.s32.totalorder %s20, 0
      %p200 = por %p198, %p199
      %p201 = scmp.ne.s32.totalorder %s187, %s188
      %p202 = scmp.eq.s32.totalorder %s21, 1
      %p203 = por %p201, %p202
      %p205 = scmp.ne.s32.totalorder %s188, %s204
      %p206 = scmp.eq.s32.totalorder %s21, 0
      %p207 = por %p205, %p206
      %p208 = scmp.le.s32.totalorder 1, %s15
      %p209 = scmp.lt.s32.totalorder %s15, 3
      %p210 = pnand %p208, %p209
      %p211 = pneg %p210
      // Predicated region
      $region9: #{tpu_custom_call.1} parent=5 // pred_check
        _
      $region10: #{tpu_custom_call.1} parent=5 // pred_check_branch
        %213 = sbr.rel (%p210) target = $region12
      $region11: #{tpu_custom_call.1} parent=5 // pred_region
        %s214 = ssub.s32 %s15, 1
        // Predicated region
        $region13: #{tpu_custom_call.1} parent=11 // pred_check
          %p215 = pneg %p130
        $region14: #{tpu_custom_call.1} parent=11 // pred_check_branch
          %217 = sbr.rel (%p215) target = $region16
        $region15: #{tpu_custom_call.1} parent=11 // pred_region
          _
        $region16: #{tpu_custom_call.1} parent=11 // pred_fallthru
          _
        // Predicated region
        $region17: #{tpu_custom_call.1} parent=11 // pred_check
          %p218 = pneg %p151
        $region18: #{tpu_custom_call.1} parent=11 // pred_check_branch
          %220 = sbr.rel (%p218) target = $region20
        $region19: #{tpu_custom_call.1} parent=11 // pred_region
          _
        $region20: #{tpu_custom_call.1} parent=11 // pred_fallthru
          _
        // Predicated region
        $region21: #{tpu_custom_call.1} parent=11 // pred_check
          %p221 = pneg %p172
        $region22: #{tpu_custom_call.1} parent=11 // pred_check_branch
          %223 = sbr.rel (%p221) target = $region24
        $region23: #{tpu_custom_call.1} parent=11 // pred_region
          _
        $region24: #{tpu_custom_call.1} parent=11 // pred_fallthru
          _
      $region12: #{tpu_custom_call.1} parent=5 // pred_fallthru
        _
      %p224 = scmp.lt.s32.totalorder %s15, 2
      // Predicated region
      $region25: #{tpu_custom_call.1} parent=5 // pred_check
        %p225 = pneg %p224
      $region26: #{tpu_custom_call.1} parent=5 // pred_check_branch
        %227 = sbr.rel (%p225) target = $region28
      $region27: #{tpu_custom_call.1} parent=5 // pred_region
        // Predicated region
        $region29: #{tpu_custom_call.1} parent=27 // pred_check
          %p228 = pneg %p47
        $region30: #{tpu_custom_call.1} parent=27 // pred_check_branch
          %230 = sbr.rel (%p228) target = $region32
        $region31: #{tpu_custom_call.1} parent=27 // pred_region
          %p231 = scmp.lt.s32.totalorder %s22, 1
          %s232 = scalar_select %p231, %s22, 1
          %s233 = smul.addr %s232, 4
          %s234 = scalar_lea.vmem %s0, %s233
        $region32: #{tpu_custom_call.1} parent=27 // pred_fallthru
          _
        // Predicated region
        $region33: #{tpu_custom_call.1} parent=27 // pred_check
          %p235 = pneg %p75
        $region34: #{tpu_custom_call.1} parent=27 // pred_check_branch
          %237 = sbr.rel (%p235) target = $region36
        $region35: #{tpu_custom_call.1} parent=27 // pred_region
          %p238 = scmp.lt.s32.totalorder %s22, 1
          %s239 = scalar_select %p238, %s22, 1
          %p240 = scmp.lt.s32.totalorder %s23, 0
          %s241 = scalar_select %p240, %s23, 0
          %s242 = sadd.s32 %s241, %s239
          %s243 = smul.addr %s242, 4
          %s244 = scalar_lea.vmem %s1, %s243
        $region36: #{tpu_custom_call.1} parent=27 // pred_fallthru
          _
        // Predicated region
        $region37: #{tpu_custom_call.1} parent=27 // pred_check
          %p245 = pneg %p103
        $region38: #{tpu_custom_call.1} parent=27 // pred_check_branch
          %247 = sbr.rel (%p245) target = $region40
        $region39: #{tpu_custom_call.1} parent=27 // pred_region
          %p248 = scmp.lt.s32.totalorder %s22, 1
          %s249 = scalar_select %p248, %s22, 1
          %p250 = scmp.lt.s32.totalorder %s23, 0
          %s251 = scalar_select %p250, %s23, 0
          %s252 = smul.addr %s249, 129
          %s253 = sadd.s32 %s251, %s252
          %s254 = smul.addr %s253, 4
          %s255 = scalar_lea.vmem %s2, %s254
        $region40: #{tpu_custom_call.1} parent=27 // pred_fallthru
          _
      $region28: #{tpu_custom_call.1} parent=5 // pred_fallthru
        _
      %p256 = scmp.le.s32.totalorder 1, %s15
      %p257 = scmp.lt.s32.totalorder %s15, 3
      %p258 = pnand %p256, %p257
      %p259 = pneg %p258
      // Predicated region
      $region41: #{tpu_custom_call.1} parent=5 // pred_check
        _
      $region42: #{tpu_custom_call.1} parent=5 // pred_check_branch
        %261 = sbr.rel (%p258) target = $region44
      $region43: #{tpu_custom_call.1} parent=5 // pred_region
        %s262 = ssub.s32 %s15, 1
        %p263 = scmp.lt.s32.totalorder %s24, 1
        %s264 = scalar_select %p263, %s24, 1
        %s265 = smul.addr %s264, 4
        %s266 = scalar_lea.vmem %s0, %s265
        %p267 = pneg %p53
        %p268 = pneg %p50
        %p269 = scmp.lt.s32.totalorder %s24, 1
        %s270 = scalar_select %p269, %s24, 1
        %p271 = scmp.lt.s32.totalorder %s25, 0
        %s272 = scalar_select %p271, %s25, 0
        %s273 = sadd.s32 %s272, %s270
        %s274 = smul.addr %s273, 4
        %s275 = scalar_lea.vmem %s1, %s274
        %p276 = pneg %p81
        %p277 = pneg %p78
        %p278 = scmp.lt.s32.totalorder %s24, 1
        %s279 = scalar_select %p278, %s24, 1
        %p280 = scmp.lt.s32.totalorder %s25, 0
        %s281 = scalar_select %p280, %s25, 0
        %s282 = smul.addr %s279, 129
        %s283 = sadd.s32 %s281, %s282
        %s284 = smul.addr %s283, 4
        %s285 = scalar_lea.vmem %s2, %s284
        %p286 = pneg %p109
        %p287 = pneg %p106
        %p288 = pneg %p130
        %p289 = pneg %p127
        %p290 = pneg %p151
        %p291 = pneg %p148
        %p292 = pneg %p172
        %p293 = pneg %p169
        %p294 = pneg %p200
        %p295 = pneg %p197
        %s296 = sand.u32 %s187, 1
        %s297 = scalar_lea.sflag [#allocation3], %s296
        %s298 = sand.u32 %s187, 1
        %s299 = smul.addr %s298, 4
        %s300 = scalar_lea.vmem [#allocation2], %s299
        %p301 = scmp.lt.s32.totalorder %s24, 1
        %s302 = scalar_select %p301, %s24, 1
        %s303 = smul.addr %s302, 4
        %s304 = scalar_lea.vmem %s0, %s303
        %p305 = scmp.lt.s32.totalorder %s24, 1
        %s306 = scalar_select %p305, %s24, 1
        %p307 = scmp.lt.s32.totalorder %s25, 0
        %s308 = scalar_select %p307, %s25, 0
        %s309 = sadd.s32 %s308, %s306
        %s310 = smul.addr %s309, 4
        %s311 = scalar_lea.vmem %s1, %s310
        %p312 = scmp.lt.s32.totalorder %s24, 1
        %s313 = scalar_select %p312, %s24, 1
        %p314 = scmp.lt.s32.totalorder %s25, 0
        %s315 = scalar_select %p314, %s25, 0
        %s316 = smul.addr %s313, 129
        %s317 = sadd.s32 %s315, %s316
        %s318 = smul.addr %s317, 4
        %s319 = scalar_lea.vmem %s2, %s318
        %v321 = vld [vmem:[%s311] sm:$0x7]
        %v322 = vld [vmem:[%s319] sm:$0xf]
        %v323 = vld [vmem:[%s319 + $0x4] sm:$0xf]
        %v324 = vld [vmem:[%s319 + $0x8] sm:$0xf]
        %v325 = vld [vmem:[%s319 + $0xc] sm:$0xf]
        %v326 = vld [vmem:[%s319 + $0x10] sm:$0xf]
        %v327 = vld [vmem:[%s319 + $0x14] sm:$0xf]
        %v328 = vld [vmem:[%s319 + $0x18] sm:$0xf]
        %v329 = vld [vmem:[%s319 + $0x1c] sm:$0xf]
        %v330 = vld [vmem:[%s319 + $0x20] sm:$0xf]
        %v331 = vld [vmem:[%s319 + $0x24] sm:$0xf]
        %v332 = vld [vmem:[%s319 + $0x28] sm:$0xf]
        %v333 = vld [vmem:[%s319 + $0x2c] sm:$0xf]
        %v334 = vld [vmem:[%s319 + $0x30] sm:$0xf]
        %v335 = vld [vmem:[%s319 + $0x34] sm:$0xf]
        %v336 = vld [vmem:[%s319 + $0x38] sm:$0xf]
        %v337 = vld [vmem:[%s319 + $0x3c] sm:$0xf]
        %v338 = vld [vmem:[%s319 + $0x40] sm:$0xf]
        %v339 = vld [vmem:[%s319 + $0x44] sm:$0xf]
        %v340 = vld [vmem:[%s319 + $0x48] sm:$0xf]
        %v341 = vld [vmem:[%s319 + $0x4c] sm:$0xf]
        %v342 = vld [vmem:[%s319 + $0x50] sm:$0xf]
        %v343 = vld [vmem:[%s319 + $0x54] sm:$0xf]
        %v344 = vld [vmem:[%s319 + $0x58] sm:$0xf]
        %v345 = vld [vmem:[%s319 + $0x5c] sm:$0xf]
        %v346 = vld [vmem:[%s319 + $0x60] sm:$0xf]
        %v347 = vld [vmem:[%s319 + $0x64] sm:$0xf]
        %v348 = vld [vmem:[%s319 + $0x68] sm:$0xf]
        %v349 = vld [vmem:[%s319 + $0x6c] sm:$0xf]
        %v350 = vld [vmem:[%s319 + $0x70] sm:$0xf]
        %v351 = vld [vmem:[%s319 + $0x74] sm:$0xf]
        %v352 = vld [vmem:[%s319 + $0x78] sm:$0xf]
        %v353 = vld [vmem:[%s319 + $0x7c] sm:$0xf]
        %v354 = vld [vmem:[%s319 + $0x80] sm:$0xf]
        %v355 = vld [vmem:[%s319 + $0x84] sm:$0xf]
        %v356 = vld [vmem:[%s319 + $0x88] sm:$0xf]
        %v357 = vld [vmem:[%s319 + $0x8c] sm:$0xf]
        %v358 = vld [vmem:[%s319 + $0x90] sm:$0xf]
        %v359 = vld [vmem:[%s319 + $0x94] sm:$0xf]
        %v360 = vld [vmem:[%s319 + $0x98] sm:$0xf]
        %v361 = vld [vmem:[%s319 + $0x9c] sm:$0xf]
        %v362 = vld [vmem:[%s319 + $0xa0] sm:$0xf]
        %v363 = vld [vmem:[%s319 + $0xa4] sm:$0xf]
        %v364 = vld [vmem:[%s319 + $0xa8] sm:$0xf]
        %v365 = vld [vmem:[%s319 + $0xac] sm:$0xf]
        %v366 = vld [vmem:[%s319 + $0xb0] sm:$0xf]
        %v367 = vld [vmem:[%s319 + $0xb4] sm:$0xf]
        %v368 = vld [vmem:[%s319 + $0xb8] sm:$0xf]
        %v369 = vld [vmem:[%s319 + $0xbc] sm:$0xf]
        %v370 = vld [vmem:[%s319 + $0xc0] sm:$0xf]
        %v371 = vld [vmem:[%s319 + $0xc4] sm:$0xf]
        %v372 = vld [vmem:[%s319 + $0xc8] sm:$0xf]
        %v373 = vld [vmem:[%s319 + $0xcc] sm:$0xf]
        %v374 = vld [vmem:[%s319 + $0xd0] sm:$0xf]
        %v375 = vld [vmem:[%s319 + $0xd4] sm:$0xf]
        %v376 = vld [vmem:[%s319 + $0xd8] sm:$0xf]
        %v377 = vld [vmem:[%s319 + $0xdc] sm:$0xf]
        %v378 = vld [vmem:[%s319 + $0xe0] sm:$0xf]
        %v379 = vld [vmem:[%s319 + $0xe4] sm:$0xf]
        %v380 = vld [vmem:[%s319 + $0xe8] sm:$0xf]
        %v381 = vld [vmem:[%s319 + $0xec] sm:$0xf]
        %v382 = vld [vmem:[%s319 + $0xf0] sm:$0xf]
        %v383 = vld [vmem:[%s319 + $0xf4] sm:$0xf]
        %v384 = vld [vmem:[%s319 + $0xf8] sm:$0xf]
        %v385 = vld [vmem:[%s319 + $0xfc] sm:$0xf]
        %v386 = vld [vmem:[%s319 + $0x100] sm:$0xf]
        %v387 = vld [vmem:[%s319 + $0x104] sm:$0xf]
        %v388 = vld [vmem:[%s319 + $0x108] sm:$0xf]
        %v389 = vld [vmem:[%s319 + $0x10c] sm:$0xf]
        %v390 = vld [vmem:[%s319 + $0x110] sm:$0xf]
        %v391 = vld [vmem:[%s319 + $0x114] sm:$0xf]
        %v392 = vld [vmem:[%s319 + $0x118] sm:$0xf]
        %v393 = vld [vmem:[%s319 + $0x11c] sm:$0xf]
        %v394 = vld [vmem:[%s319 + $0x120] sm:$0xf]
        %v395 = vld [vmem:[%s319 + $0x124] sm:$0xf]
        %v396 = vld [vmem:[%s319 + $0x128] sm:$0xf]
        %v397 = vld [vmem:[%s319 + $0x12c] sm:$0xf]
        %v398 = vld [vmem:[%s319 + $0x130] sm:$0xf]
        %v399 = vld [vmem:[%s319 + $0x134] sm:$0xf]
        %v400 = vld [vmem:[%s319 + $0x138] sm:$0xf]
        %v401 = vld [vmem:[%s319 + $0x13c] sm:$0xf]
        %v402 = vld [vmem:[%s319 + $0x140] sm:$0xf]
        %v403 = vld [vmem:[%s319 + $0x144] sm:$0xf]
        %v404 = vld [vmem:[%s319 + $0x148] sm:$0xf]
        %v405 = vld [vmem:[%s319 + $0x14c] sm:$0xf]
        %v406 = vld [vmem:[%s319 + $0x150] sm:$0xf]
        %v407 = vld [vmem:[%s319 + $0x154] sm:$0xf]
        %v408 = vld [vmem:[%s319 + $0x158] sm:$0xf]
        %v409 = vld [vmem:[%s319 + $0x15c] sm:$0xf]
        %v410 = vld [vmem:[%s319 + $0x160] sm:$0xf]
        %v411 = vld [vmem:[%s319 + $0x164] sm:$0xf]
        %v412 = vld [vmem:[%s319 + $0x168] sm:$0xf]
        %v413 = vld [vmem:[%s319 + $0x16c] sm:$0xf]
        %v414 = vld [vmem:[%s319 + $0x170] sm:$0xf]
        %v415 = vld [vmem:[%s319 + $0x174] sm:$0xf]
        %v416 = vld [vmem:[%s319 + $0x178] sm:$0xf]
        %v417 = vld [vmem:[%s319 + $0x17c] sm:$0xf]
        %v418 = vld [vmem:[%s319 + $0x180] sm:$0xf]
        %v419 = vld [vmem:[%s319 + $0x184] sm:$0xf]
        %v420 = vld [vmem:[%s319 + $0x188] sm:$0xf]
        %v421 = vld [vmem:[%s319 + $0x18c] sm:$0xf]
        %v422 = vld [vmem:[%s319 + $0x190] sm:$0xf]
        %v423 = vld [vmem:[%s319 + $0x194] sm:$0xf]
        %v424 = vld [vmem:[%s319 + $0x198] sm:$0xf]
        %v425 = vld [vmem:[%s319 + $0x19c] sm:$0xf]
        %v426 = vld [vmem:[%s319 + $0x1a0] sm:$0xf]
        %v427 = vld [vmem:[%s319 + $0x1a4] sm:$0xf]
        %v428 = vld [vmem:[%s319 + $0x1a8] sm:$0xf]
        %v429 = vld [vmem:[%s319 + $0x1ac] sm:$0xf]
        %v430 = vld [vmem:[%s319 + $0x1b0] sm:$0xf]
        %v431 = vld [vmem:[%s319 + $0x1b4] sm:$0xf]
        %v432 = vld [vmem:[%s319 + $0x1b8] sm:$0xf]
        %v433 = vld [vmem:[%s319 + $0x1bc] sm:$0xf]
        %v434 = vld [vmem:[%s319 + $0x1c0] sm:$0xf]
        %v435 = vld [vmem:[%s319 + $0x1c4] sm:$0xf]
        %v436 = vld [vmem:[%s319 + $0x1c8] sm:$0xf]
        %v437 = vld [vmem:[%s319 + $0x1cc] sm:$0xf]
        %v438 = vld [vmem:[%s319 + $0x1d0] sm:$0xf]
        %v439 = vld [vmem:[%s319 + $0x1d4] sm:$0xf]
        %v440 = vld [vmem:[%s319 + $0x1d8] sm:$0xf]
        %v441 = vld [vmem:[%s319 + $0x1dc] sm:$0xf]
        %v442 = vld [vmem:[%s319 + $0x1e0] sm:$0xf]
        %v443 = vld [vmem:[%s319 + $0x1e4] sm:$0xf]
        %v444 = vld [vmem:[%s319 + $0x1e8] sm:$0xf]
        %v445 = vld [vmem:[%s319 + $0x1ec] sm:$0xf]
        %v446 = vld [vmem:[%s319 + $0x1f0] sm:$0xf]
        %v447 = vld [vmem:[%s319 + $0x1f4] sm:$0xf]
        %v448 = vld [vmem:[%s319 + $0x1f8] sm:$0xf]
        %v449 = vld [vmem:[%s319 + $0x1fc] sm:$0xf]
        %v450 = vld [vmem:[%s319 + $0x200] sm:$0x3]
        %v451 = vld [vmem:[%s3] sm:$0xff]
        %v452 = vld [vmem:[%s3 + $0x8] sm:$0xff]
        %v453 = vld [vmem:[%s3 + $0x10] sm:$0xff]
        %v454 = vld [vmem:[%s3 + $0x18] sm:$0xff]
        %v455 = vld [vmem:[%s3 + $0x20] sm:$0xf]
        %v456 = vld [vmem:[%s3 + $0x24] sm:$0xff]
        %v457 = vld [vmem:[%s3 + $0x2c] sm:$0xff]
        %v458 = vld [vmem:[%s3 + $0x34] sm:$0xff]
        %v459 = vld [vmem:[%s3 + $0x3c] sm:$0xff]
        %v460 = vld [vmem:[%s3 + $0x44] sm:$0xf]
        %v461 = vld [vmem:[%s4] sm:$0xff]
        %v462 = vld [vmem:[%s4 + $0x8] sm:$0xff]
        %464 = vset.pattern.permute.xlu0 0
        %465 = vperm.xlu0 %464, %v461
        %v466 = vpop.permute.xlu0 %465
        %469 = vset.pattern.permute.xlu0 0
        %470 = vperm.xlu0 %469, %v462
        %v471 = vpop.permute.xlu0 %470
        %v473 = vlaneseq
        %v474 = vshrl.u32 %v473, 7
        %v475 = vsub.s32 0, %v474
        %v476 = vrot.slane %v321, %v475
        %v477 = vmul.f32 %v466, %v476
        %v478 = vmul.f32 %v471, %v476
        %479 = vset.pattern.permute.xlu0 1
        %480 = vperm.xlu0 %479, %v461
        %v481 = vpop.permute.xlu0 %480
        %483 = vset.pattern.permute.xlu0 1
        %484 = vperm.xlu0 %483, %v462
        %v485 = vpop.permute.xlu0 %484
        %v487 = vlaneseq
        %v488 = vshrl.u32 %v487, 7
        %v489 = vsub.s32 1, %v488
        %v490 = vrot.slane %v321, %v489
        %v491 = vmul.f32 %v481, %v490
        %v492 = vmul.f32 %v485, %v490
        %v493 = vadd.f32 %v477, %v491
        %v494 = vadd.f32 %v478, %v492
        %495 = vset.pattern.permute.xlu0 2
        %496 = vperm.xlu0 %495, %v461
        %v497 = vpop.permute.xlu0 %496
        %499 = vset.pattern.permute.xlu0 2
        %500 = vperm.xlu0 %499, %v462
        %v501 = vpop.permute.xlu0 %500
        %v503 = vlaneseq
        %v504 = vshrl.u32 %v503, 7
        %v505 = vsub.s32 2, %v504
        %v506 = vrot.slane %v321, %v505
        %v507 = vmul.f32 %v497, %v506
        %v508 = vmul.f32 %v501, %v506
        %v509 = vadd.f32 %v493, %v507
        %v510 = vadd.f32 %v494, %v508
        %v511 = vld [vmem:[%s5] sm:$0xff]
        %v512 = vld [vmem:[%s5 + $0x8] sm:$0xff]
        %514 = vset.pattern.permute.xlu0 0
        %515 = vperm.xlu0 %514, %v511
        %v516 = vpop.permute.xlu0 %515
        %519 = vset.pattern.permute.xlu0 0
        %520 = vperm.xlu0 %519, %v512
        %v521 = vpop.permute.xlu0 %520
        %v533 = vunpack.c.l.b16 %v451
        %v534 = vunpack.c.h.b16 %v451
        %v535 = vunpack.c.l.b16 %v452
        %v536 = vunpack.c.h.b16 %v452
        %v537 = vunpack.c.l.b16 %v453
        %v538 = vunpack.c.h.b16 %v453
        %v539 = vunpack.c.l.b16 %v454
        %v540 = vunpack.c.h.b16 %v454
        %v541 = vunpack.c.l.b16 %v455
        %v542 = vunpack.c.l.b16 %v456
        %v543 = vunpack.c.h.b16 %v456
        %v544 = vunpack.c.l.b16 %v457
        %v545 = vunpack.c.h.b16 %v457
        %v546 = vunpack.c.l.b16 %v458
        %v547 = vunpack.c.h.b16 %v458
        %v548 = vunpack.c.l.b16 %v459
        %v549 = vunpack.c.h.b16 %v459
        %v550 = vunpack.c.l.b16 %v460
        %v551 = vpack.c.b16 %v542, %v533
        %v552 = vpack.c.b16 %v543, %v534
        %v553 = vpack.c.b16 %v544, %v535
        %v554 = vpack.c.b16 %v545, %v536
        %v555 = vpack.c.b16 %v546, %v537
        %v556 = vpack.c.b16 %v547, %v538
        %v557 = vpack.c.b16 %v548, %v539
        %v558 = vpack.c.b16 %v549, %v540
        %v559 = vpack.c.b16 %v550, %v541
        %v697 = vunpack.c.l.b16 %v322
        %v698 = vunpack.c.l.b16 %v323
        %v699 = vunpack.c.l.b16 %v324
        %v700 = vunpack.c.l.b16 %v325
        %v701 = vunpack.c.l.b16 %v326
        %v702 = vunpack.c.l.b16 %v327
        %v703 = vunpack.c.l.b16 %v328
        %v704 = vunpack.c.l.b16 %v329
        %v705 = vunpack.c.l.b16 %v330
        %v706 = vunpack.c.l.b16 %v331
        %v707 = vunpack.c.l.b16 %v332
        %v708 = vunpack.c.l.b16 %v333
        %v709 = vunpack.c.l.b16 %v334
        %v710 = vunpack.c.l.b16 %v335
        %v711 = vunpack.c.l.b16 %v336
        %v712 = vunpack.c.l.b16 %v337
        %v713 = vunpack.c.l.b16 %v338
        %v714 = vunpack.c.l.b16 %v339
        %v715 = vunpack.c.l.b16 %v340
        %v716 = vunpack.c.l.b16 %v341
        %v717 = vunpack.c.l.b16 %v342
        %v718 = vunpack.c.l.b16 %v343
        %v719 = vunpack.c.l.b16 %v344
        %v720 = vunpack.c.l.b16 %v345
        %v721 = vunpack.c.l.b16 %v346
        %v722 = vunpack.c.l.b16 %v347
        %v723 = vunpack.c.l.b16 %v348
        %v724 = vunpack.c.l.b16 %v349
        %v725 = vunpack.c.l.b16 %v350
        %v726 = vunpack.c.l.b16 %v351
        %v727 = vunpack.c.l.b16 %v352
        %v728 = vunpack.c.l.b16 %v353
        %v729 = vunpack.c.l.b16 %v354
        %v730 = vunpack.c.l.b16 %v355
        %v731 = vunpack.c.l.b16 %v356
        %v732 = vunpack.c.l.b16 %v357
        %v733 = vunpack.c.l.b16 %v358
        %v734 = vunpack.c.l.b16 %v359
        %v735 = vunpack.c.l.b16 %v360
        %v736 = vunpack.c.l.b16 %v361
        %v737 = vunpack.c.l.b16 %v362
        %v738 = vunpack.c.l.b16 %v363
        %v739 = vunpack.c.l.b16 %v364
        %v740 = vunpack.c.l.b16 %v365
        %v741 = vunpack.c.l.b16 %v366
        %v742 = vunpack.c.l.b16 %v367
        %v743 = vunpack.c.l.b16 %v368
        %v744 = vunpack.c.l.b16 %v369
        %v745 = vunpack.c.l.b16 %v370
        %v746 = vunpack.c.l.b16 %v371
        %v747 = vunpack.c.l.b16 %v372
        %v748 = vunpack.c.l.b16 %v373
        %v749 = vunpack.c.l.b16 %v374
        %v750 = vunpack.c.l.b16 %v375
        %v751 = vunpack.c.l.b16 %v376
        %v752 = vunpack.c.l.b16 %v377
        %v753 = vunpack.c.l.b16 %v378
        %v754 = vunpack.c.l.b16 %v379
        %v755 = vunpack.c.l.b16 %v380
        %v756 = vunpack.c.l.b16 %v381
        %v757 = vunpack.c.l.b16 %v382
        %v758 = vunpack.c.l.b16 %v383
        %v759 = vunpack.c.l.b16 %v384
        %v760 = vunpack.c.l.b16 %v385
        %v761 = vunpack.c.l.b16 %v386
        %v762 = vunpack.c.l.b16 %v387
        %v763 = vunpack.c.l.b16 %v388
        %v764 = vunpack.c.l.b16 %v389
        %v765 = vunpack.c.l.b16 %v390
        %v766 = vunpack.c.l.b16 %v391
        %v767 = vunpack.c.l.b16 %v392
        %v768 = vunpack.c.l.b16 %v393
        %v769 = vunpack.c.l.b16 %v394
        %v770 = vunpack.c.l.b16 %v395
        %v771 = vunpack.c.l.b16 %v396
        %v772 = vunpack.c.l.b16 %v397
        %v773 = vunpack.c.l.b16 %v398
        %v774 = vunpack.c.l.b16 %v399
        %v775 = vunpack.c.l.b16 %v400
        %v776 = vunpack.c.l.b16 %v401
        %v777 = vunpack.c.l.b16 %v402
        %v778 = vunpack.c.l.b16 %v403
        %v779 = vunpack.c.l.b16 %v404
        %v780 = vunpack.c.l.b16 %v405
        %v781 = vunpack.c.l.b16 %v406
        %v782 = vunpack.c.l.b16 %v407
        %v783 = vunpack.c.l.b16 %v408
        %v784 = vunpack.c.l.b16 %v409
        %v785 = vunpack.c.l.b16 %v410
        %v786 = vunpack.c.l.b16 %v411
        %v787 = vunpack.c.l.b16 %v412
        %v788 = vunpack.c.l.b16 %v413
        %v789 = vunpack.c.l.b16 %v414
        %v790 = vunpack.c.l.b16 %v415
        %v791 = vunpack.c.l.b16 %v416
        %v792 = vunpack.c.l.b16 %v417
        %v793 = vunpack.c.l.b16 %v418
        %v794 = vunpack.c.l.b16 %v419
        %v795 = vunpack.c.l.b16 %v420
        %v796 = vunpack.c.l.b16 %v421
        %v797 = vunpack.c.l.b16 %v422
        %v798 = vunpack.c.l.b16 %v423
        %v799 = vunpack.c.l.b16 %v424
        %v800 = vunpack.c.l.b16 %v425
        %v801 = vunpack.c.l.b16 %v426
        %v802 = vunpack.c.l.b16 %v427
        %v803 = vunpack.c.l.b16 %v428
        %v804 = vunpack.c.l.b16 %v429
        %v805 = vunpack.c.l.b16 %v430
        %v806 = vunpack.c.l.b16 %v431
        %v807 = vunpack.c.l.b16 %v432
        %v808 = vunpack.c.l.b16 %v433
        %v809 = vunpack.c.l.b16 %v434
        %v810 = vunpack.c.l.b16 %v435
        %v811 = vunpack.c.l.b16 %v436
        %v812 = vunpack.c.l.b16 %v437
        %v813 = vunpack.c.l.b16 %v438
        %v814 = vunpack.c.l.b16 %v439
        %v815 = vunpack.c.l.b16 %v440
        %v816 = vunpack.c.l.b16 %v441
        %v817 = vunpack.c.l.b16 %v442
        %v818 = vunpack.c.l.b16 %v443
        %v819 = vunpack.c.l.b16 %v444
        %v820 = vunpack.c.l.b16 %v445
        %v821 = vunpack.c.l.b16 %v446
        %v822 = vunpack.c.l.b16 %v447
        %v823 = vunpack.c.l.b16 %v448
        %v824 = vunpack.c.l.b16 %v449
        %v825 = vunpack.c.l.b16 %v450
        %v826 = vpack.c.b16 %v698, %v697
        %v827 = vpack.c.b16 %v700, %v699
        %v828 = vpack.c.b16 %v702, %v701
        %v829 = vpack.c.b16 %v704, %v703
        %v830 = vpack.c.b16 %v706, %v705
        %v831 = vpack.c.b16 %v708, %v707
        %v832 = vpack.c.b16 %v710, %v709
        %v833 = vpack.c.b16 %v712, %v711
        %v834 = vpack.c.b16 %v714, %v713
        %v835 = vpack.c.b16 %v716, %v715
        %v836 = vpack.c.b16 %v718, %v717
        %v837 = vpack.c.b16 %v720, %v719
        %v838 = vpack.c.b16 %v722, %v721
        %v839 = vpack.c.b16 %v724, %v723
        %v840 = vpack.c.b16 %v726, %v725
        %v841 = vpack.c.b16 %v728, %v727
        %v842 = vpack.c.b16 %v730, %v729
        %v843 = vpack.c.b16 %v732, %v731
        %v844 = vpack.c.b16 %v734, %v733
        %v845 = vpack.c.b16 %v736, %v735
        %v846 = vpack.c.b16 %v738, %v737
        %v847 = vpack.c.b16 %v740, %v739
        %v848 = vpack.c.b16 %v742, %v741
        %v849 = vpack.c.b16 %v744, %v743
        %v850 = vpack.c.b16 %v746, %v745
        %v851 = vpack.c.b16 %v748, %v747
        %v852 = vpack.c.b16 %v750, %v749
        %v853 = vpack.c.b16 %v752, %v751
        %v854 = vpack.c.b16 %v754, %v753
        %v855 = vpack.c.b16 %v756, %v755
        %v856 = vpack.c.b16 %v758, %v757
        %v857 = vpack.c.b16 %v760, %v759
        %v858 = vpack.c.b16 %v762, %v761
        %v859 = vpack.c.b16 %v764, %v763
        %v860 = vpack.c.b16 %v766, %v765
        %v861 = vpack.c.b16 %v768, %v767
        %v862 = vpack.c.b16 %v770, %v769
        %v863 = vpack.c.b16 %v772, %v771
        %v864 = vpack.c.b16 %v774, %v773
        %v865 = vpack.c.b16 %v776, %v775
        %v866 = vpack.c.b16 %v778, %v777
        %v867 = vpack.c.b16 %v780, %v779
        %v868 = vpack.c.b16 %v782, %v781
        %v869 = vpack.c.b16 %v784, %v783
        %v870 = vpack.c.b16 %v786, %v785
        %v871 = vpack.c.b16 %v788, %v787
        %v872 = vpack.c.b16 %v790, %v789
        %v873 = vpack.c.b16 %v792, %v791
        %v874 = vpack.c.b16 %v794, %v793
        %v875 = vpack.c.b16 %v796, %v795
        %v876 = vpack.c.b16 %v798, %v797
        %v877 = vpack.c.b16 %v800, %v799
        %v878 = vpack.c.b16 %v802, %v801
        %v879 = vpack.c.b16 %v804, %v803
        %v880 = vpack.c.b16 %v806, %v805
        %v881 = vpack.c.b16 %v808, %v807
        %v882 = vpack.c.b16 %v810, %v809
        %v883 = vpack.c.b16 %v812, %v811
        %v884 = vpack.c.b16 %v814, %v813
        %v885 = vpack.c.b16 %v816, %v815
        %v886 = vpack.c.b16 %v818, %v817
        %v887 = vpack.c.b16 %v820, %v819
        %v888 = vpack.c.b16 %v822, %v821
        %v889 = vpack.c.b16 %v824, %v823
        %v890 = vpack.c.b16 %v825, %v825
        %vm955 = vcmask 23552
        %v957 = vsel %vm955, %v559, 0
        %vm959 = vcmask 1040384
        %vm960 = vcmask 1041408
        %v961 = vsel %vm959, 4294967295, 65535
        %v962 = vsel %vm960, %v961, 0
        %v964 = vand.u32 %v890, %v962
        %966 = vmatprep.subr.bf16.mxu0 0
        %967 = vmatpush1.bf16.msra.mxu0 %v826
        %968 = vmatprep.subr.bf16.mxu0 0
        %969 = vmatpush1.bf16.msra.mxu0 %v827
        %970 = vmatprep.subr.bf16.mxu0 0
        %971 = vmatpush1.bf16.msra.mxu0 %v828
        %972 = vmatprep.subr.bf16.mxu0 0
        %973 = vmatpush1.bf16.msra.mxu0 %v829
        %974 = vmatprep.subr.bf16.mxu0 0
        %975 = vmatpush1.bf16.msra.mxu0 %v830
        %976 = vmatprep.subr.bf16.mxu0 0
        %977 = vmatpush1.bf16.msra.mxu0 %v831
        %978 = vmatprep.subr.bf16.mxu0 0
        %979 = vmatpush1.bf16.msra.mxu0 %v832
        %980 = vmatprep.subr.bf16.mxu0 0
        %981 = vmatpush1.bf16.msra.mxu0 %v833
        %982 = vmatprep.subr.bf16.mxu0 0
        %983 = vmatpush1.bf16.msra.mxu0 %v834
        %984 = vmatprep.subr.bf16.mxu0 0
        %985 = vmatpush1.bf16.msra.mxu0 %v835
        %986 = vmatprep.subr.bf16.mxu0 0
        %987 = vmatpush1.bf16.msra.mxu0 %v836
        %988 = vmatprep.subr.bf16.mxu0 0
        %989 = vmatpush1.bf16.msra.mxu0 %v837
        %990 = vmatprep.subr.bf16.mxu0 0
        %991 = vmatpush1.bf16.msra.mxu0 %v838
        %992 = vmatprep.subr.bf16.mxu0 0
        %993 = vmatpush1.bf16.msra.mxu0 %v839
        %994 = vmatprep.subr.bf16.mxu0 0
        %995 = vmatpush1.bf16.msra.mxu0 %v840
        %996 = vmatprep.subr.bf16.mxu0 0
        %997 = vmatpush1.bf16.msra.mxu0 %v841
        %998 = vmatprep.mubr.bf16.mxu0 %v552
        %999 = vmatmul.mubr.bf16.gmra.mrb[0].mxu0 %v551
        %v1000 = vpop.f32.mrb[0].mxu0
        %v1001 = vadd.f32 %v516, %v1000
        %v1002 = vpop.f32.mrb[0].mxu0
        %v1003 = vpop.f32.mrb[0].mxu0
        %v1004 = vadd.f32 %v521, %v1003
        %v1005 = vpop.f32.mrb[0].mxu0
        %1006 = vdwg.mxu0
        %1007 = vmatprep.subr.bf16.mxu0 0
        %1008 = vmatpush1.bf16.msra.mxu0 %v842
        %1009 = vmatprep.subr.bf16.mxu0 0
        %1010 = vmatpush1.bf16.msra.mxu0 %v843
        %1011 = vmatprep.subr.bf16.mxu0 0
        %1012 = vmatpush1.bf16.msra.mxu0 %v844
        %1013 = vmatprep.subr.bf16.mxu0 0
        %1014 = vmatpush1.bf16.msra.mxu0 %v845
        %1015 = vmatprep.subr.bf16.mxu0 0
        %1016 = vmatpush1.bf16.msra.mxu0 %v846
        %1017 = vmatprep.subr.bf16.mxu0 0
        %1018 = vmatpush1.bf16.msra.mxu0 %v847
        %1019 = vmatprep.subr.bf16.mxu0 0
        %1020 = vmatpush1.bf16.msra.mxu0 %v848
        %1021 = vmatprep.subr.bf16.mxu0 0
        %1022 = vmatpush1.bf16.msra.mxu0 %v849
        %1023 = vmatprep.subr.bf16.mxu0 0
        %1024 = vmatpush1.bf16.msra.mxu0 %v850
        %1025 = vmatprep.subr.bf16.mxu0 0
        %1026 = vmatpush1.bf16.msra.mxu0 %v851
        %1027 = vmatprep.subr.bf16.mxu0 0
        %1028 = vmatpush1.bf16.msra.mxu0 %v852
        %1029 = vmatprep.subr.bf16.mxu0 0
        %1030 = vmatpush1.bf16.msra.mxu0 %v853
        %1031 = vmatprep.subr.bf16.mxu0 0
        %1032 = vmatpush1.bf16.msra.mxu0 %v854
        %1033 = vmatprep.subr.bf16.mxu0 0
        %1034 = vmatpush1.bf16.msra.mxu0 %v855
        %1035 = vmatprep.subr.bf16.mxu0 0
        %1036 = vmatpush1.bf16.msra.mxu0 %v856
        %1037 = vmatprep.subr.bf16.mxu0 0
        %1038 = vmatpush1.bf16.msra.mxu0 %v857
        %1039 = vmatprep.mubr.bf16.mxu0 %v554
        %1040 = vmatmul.mubr.bf16.gmra.mrb[0].mxu0 %v553
        %v1041 = vpop.f32.mrb[0].mxu0
        %v1042 = vadd.f32 %v1001, %v1041
        %v1043 = vpop.f32.mrb[0].mxu0
        %v1044 = vpop.f32.mrb[0].mxu0
        %v1045 = vadd.f32 %v1004, %v1044
        %v1046 = vpop.f32.mrb[0].mxu0
        %1047 = vdwg.mxu0
        %1048 = vmatprep.subr.bf16.mxu0 0
        %1049 = vmatpush1.bf16.msra.mxu0 %v858
        %1050 = vmatprep.subr.bf16.mxu0 0
        %1051 = vmatpush1.bf16.msra.mxu0 %v859
        %1052 = vmatprep.subr.bf16.mxu0 0
        %1053 = vmatpush1.bf16.msra.mxu0 %v860
        %1054 = vmatprep.subr.bf16.mxu0 0
        %1055 = vmatpush1.bf16.msra.mxu0 %v861
        %1056 = vmatprep.subr.bf16.mxu0 0
        %1057 = vmatpush1.bf16.msra.mxu0 %v862
        %1058 = vmatprep.subr.bf16.mxu0 0
        %1059 = vmatpush1.bf16.msra.mxu0 %v863
        %1060 = vmatprep.subr.bf16.mxu0 0
        %1061 = vmatpush1.bf16.msra.mxu0 %v864
        %1062 = vmatprep.subr.bf16.mxu0 0
        %1063 = vmatpush1.bf16.msra.mxu0 %v865
        %1064 = vmatprep.subr.bf16.mxu0 0
        %1065 = vmatpush1.bf16.msra.mxu0 %v866
        %1066 = vmatprep.subr.bf16.mxu0 0
        %1067 = vmatpush1.bf16.msra.mxu0 %v867
        %1068 = vmatprep.subr.bf16.mxu0 0
        %1069 = vmatpush1.bf16.msra.mxu0 %v868
        %1070 = vmatprep.subr.bf16.mxu0 0
        %1071 = vmatpush1.bf16.msra.mxu0 %v869
        %1072 = vmatprep.subr.bf16.mxu0 0
        %1073 = vmatpush1.bf16.msra.mxu0 %v870
        %1074 = vmatprep.subr.bf16.mxu0 0
        %1075 = vmatpush1.bf16.msra.mxu0 %v871
        %1076 = vmatprep.subr.bf16.mxu0 0
        %1077 = vmatpush1.bf16.msra.mxu0 %v872
        %1078 = vmatprep.subr.bf16.mxu0 0
        %1079 = vmatpush1.bf16.msra.mxu0 %v873
        %1080 = vmatprep.mubr.bf16.mxu0 %v556
        %1081 = vmatmul.mubr.bf16.gmra.mrb[0].mxu0 %v555
        %v1082 = vpop.f32.mrb[0].mxu0
        %v1083 = vadd.f32 %v1042, %v1082
        %v1084 = vpop.f32.mrb[0].mxu0
        %v1085 = vpop.f32.mrb[0].mxu0
        %v1086 = vadd.f32 %v1045, %v1085
        %v1087 = vpop.f32.mrb[0].mxu0
        %1088 = vdwg.mxu0
        %1089 = vmatprep.subr.bf16.mxu0 0
        %1090 = vmatpush1.bf16.msra.mxu0 %v874
        %1091 = vmatprep.subr.bf16.mxu0 0
        %1092 = vmatpush1.bf16.msra.mxu0 %v875
        %1093 = vmatprep.subr.bf16.mxu0 0
        %1094 = vmatpush1.bf16.msra.mxu0 %v876
        %1095 = vmatprep.subr.bf16.mxu0 0
        %1096 = vmatpush1.bf16.msra.mxu0 %v877
        %1097 = vmatprep.subr.bf16.mxu0 0
        %1098 = vmatpush1.bf16.msra.mxu0 %v878
        %1099 = vmatprep.subr.bf16.mxu0 0
        %1100 = vmatpush1.bf16.msra.mxu0 %v879
        %1101 = vmatprep.subr.bf16.mxu0 0
        %1102 = vmatpush1.bf16.msra.mxu0 %v880
        %1103 = vmatprep.subr.bf16.mxu0 0
        %1104 = vmatpush1.bf16.msra.mxu0 %v881
        %1105 = vmatprep.subr.bf16.mxu0 0
        %1106 = vmatpush1.bf16.msra.mxu0 %v882
        %1107 = vmatprep.subr.bf16.mxu0 0
        %1108 = vmatpush1.bf16.msra.mxu0 %v883
        %1109 = vmatprep.subr.bf16.mxu0 0
        %1110 = vmatpush1.bf16.msra.mxu0 %v884
        %1111 = vmatprep.subr.bf16.mxu0 0
        %1112 = vmatpush1.bf16.msra.mxu0 %v885
        %1113 = vmatprep.subr.bf16.mxu0 0
        %1114 = vmatpush1.bf16.msra.mxu0 %v886
        %1115 = vmatprep.subr.bf16.mxu0 0
        %1116 = vmatpush1.bf16.msra.mxu0 %v887
        %1117 = vmatprep.subr.bf16.mxu0 0
        %1118 = vmatpush1.bf16.msra.mxu0 %v888
        %1119 = vmatprep.subr.bf16.mxu0 0
        %1120 = vmatpush1.bf16.msra.mxu0 %v889
        %1121 = vmatprep.mubr.bf16.mxu0 %v558
        %1122 = vmatmul.mubr.bf16.gmra.mrb[0].mxu0 %v557
        %v1123 = vpop.f32.mrb[0].mxu0
        %v1124 = vadd.f32 %v1083, %v1123
        %v1125 = vpop.f32.mrb[0].mxu0
        %v1126 = vpop.f32.mrb[0].mxu0
        %v1127 = vadd.f32 %v1086, %v1126
        %v1128 = vpop.f32.mrb[0].mxu0
        %1129 = vdwg.mxu0
        %1130 = vmatprep.subr.bf16.mxu0 0
        %1131 = vmatpush1.bf16.msra.mxu0 %v964
        %1132 = vmatprep.subr.bf16.mxu0 0
        %1133 = vmatpush1.bf16.msra.mxu0 0
        %1134 = vmatprep.subr.bf16.mxu0 0
        %1135 = vmatpush1.bf16.msra.mxu0 0
        %1136 = vmatprep.subr.bf16.mxu0 0
        %1137 = vmatpush1.bf16.msra.mxu0 0
        %1138 = vmatprep.subr.bf16.mxu0 0
        %1139 = vmatpush1.bf16.msra.mxu0 0
        %1140 = vmatprep.subr.bf16.mxu0 0
        %1141 = vmatpush1.bf16.msra.mxu0 0
        %1142 = vmatprep.subr.bf16.mxu0 0
        %1143 = vmatpush1.bf16.msra.mxu0 0
        %1144 = vmatprep.subr.bf16.mxu0 0
        %1145 = vmatpush1.bf16.msra.mxu0 0
        %1146 = vmatprep.subr.bf16.mxu0 0
        %1147 = vmatpush1.bf16.msra.mxu0 0
        %1148 = vmatprep.subr.bf16.mxu0 0
        %1149 = vmatpush1.bf16.msra.mxu0 0
        %1150 = vmatprep.subr.bf16.mxu0 0
        %1151 = vmatpush1.bf16.msra.mxu0 0
        %1152 = vmatprep.subr.bf16.mxu0 0
        %1153 = vmatpush1.bf16.msra.mxu0 0
        %1154 = vmatprep.subr.bf16.mxu0 0
        %1155 = vmatpush1.bf16.msra.mxu0 0
        %1156 = vmatprep.subr.bf16.mxu0 0
        %1157 = vmatpush1.bf16.msra.mxu0 0
        %1158 = vmatprep.subr.bf16.mxu0 0
        %1159 = vmatpush1.bf16.msra.mxu0 0
        %1160 = vmatprep.subr.bf16.mxu0 0
        %1161 = vmatpush1.bf16.msra.mxu0 0
        %1162 = vmatprep.mubr.bf16.mxu0 0
        %1163 = vmatmul.mubr.bf16.gmra.mrb[0].mxu0 %v957
        %v1164 = vpop.f32.mrb[0].mxu0
        %v1165 = vadd.f32 %v1124, %v1164
        %v1166 = vpop.f32.mrb[0].mxu0
        %v1167 = vpop.f32.mrb[0].mxu0
        %v1168 = vadd.f32 %v1127, %v1167
        %v1169 = vpop.f32.mrb[0].mxu0
        %1170 = vdwg.mxu0
        %v1171 = vadd.f32 %v1165, %v509
        %v1172 = vadd.f32 %v1168, %v510
        %v1173 = vld [vmem:[%s304] sm:$0xf]
        %vm1174 = vcmask 1043456
        %v1175 = vsel %vm1174, %v1173, 0.0
        %1176 = vadd.xlane.f32.xlu0 %v1175
        %v1177 = vpop.xlane.xlu0 %1176
        %v1178 = vmul.f32 %v1177, 0.0625
        %v1179 = vsub.f32 %v1173, %v1178
        %v1180 = vmul.f32 %v1179, %v1179
        %v1181 = vsel %vm1174, %v1180, 0.0
        %1182 = vadd.xlane.f32.xlu0 %v1181
        %v1183 = vpop.xlane.xlu0 %1182
        %v1184 = vmul.f32 %v1178, %v1178
        %v1185 = vmul.f32 %v1184, 112.0
        %v1186 = vsub.f32 %v1183, %v1185
        %v1187 = vmul.f32 %v1186, 0.0625
        %v1188 = vmax.f32 %v1187, 0.0
        %v1189 = vadd.f32 %v1188, 1e-05
        %v1190 = vrsqrt.pop %v1189
        %s1191 = smul.u32 %s25, 128
        %s1192 = sshra.s32 %s1191, 7
        %s1193 = sand.u32 %s1191, 127
        %s1194 = scalar_lea.vmem %s304, %s1192
        %v1195 = vld [vmem:[%s1194] sm:$0xf]
        %v1196 = vsub.f32 %v1195, %v1178
        %v1197 = vmul.f32 %v1196, %v1190
        %v1198 = vmul.f32 %v1197, %v1172
        %v1199 = vadd.f32 %v1198, %v1171
        %1200 = vst [vmem:[%s300] sm:$0xf] %v1199
        %s1201 = sand.u32 %s187, 1
        %s1202 = scalar_lea.sflag [#allocation3], %s1201
        %s1203 = sand.u32 %s187, 1
        %s1204 = smul.addr %s1203, 4
        %s1205 = scalar_lea.vmem [#allocation2], %s1204
        // Predicated region
        $region45: #{tpu_custom_call.1} parent=43 // pred_check
          %p1206 = pneg %p197
        $region46: #{tpu_custom_call.1} parent=43 // pred_check_branch
          %1208 = sbr.rel (%p1206) target = $region48
        $region47: #{tpu_custom_call.1} parent=43 // pred_region
          %s1210 = ssub.s32 64, 64
          %1211 = vsyncadd %s1202, %s1210
          %s1212 = sadd.s32 %s25, %s24
          %s1213 = smul.addr %s1212, 64
          %s1214 = scalar_lea.hbm %s6, %s1213
          %s1216 = sshll.u32 %s1205, 4
          %s1217 = int_to_ptr.vmem [resolvable:$true] %s1216
          %1219 = dma.vmem_to_hbm [thread:$0]  %s1217, 64, %s1214, %s1202
        $region48: #{tpu_custom_call.1} parent=43 // pred_fallthru
          _
      $region44: #{tpu_custom_call.1} parent=5 // pred_fallthru
        _
      %p1220 = scmp.le.s32.totalorder 2, %s15
      // Predicated region
      $region49: #{tpu_custom_call.1} parent=5 // pred_check
        %p1221 = pneg %p1220
      $region50: #{tpu_custom_call.1} parent=5 // pred_check_branch
        %1223 = sbr.rel (%p1221) target = $region52
      $region51: #{tpu_custom_call.1} parent=5 // pred_region
        %s1224 = ssub.s32 %s15, 2
        // Predicated region
        $region53: #{tpu_custom_call.1} parent=51 // pred_check
          %p1225 = pneg %p203
        $region54: #{tpu_custom_call.1} parent=51 // pred_check_branch
          %1227 = sbr.rel (%p1225) target = $region56
        $region55: #{tpu_custom_call.1} parent=51 // pred_region
          %s1228 = sand.u32 %s188, 1
          %s1229 = scalar_lea.sflag [#allocation3], %s1228
          %s1230 = sand.u32 %s188, 1
          %s1231 = smul.addr %s1230, 4
          %s1232 = scalar_lea.vmem [#allocation2], %s1231
          %1233 = dma.done %s1229, 64
        $region56: #{tpu_custom_call.1} parent=51 // pred_fallthru
          _
      $region52: #{tpu_custom_call.1} parent=5 // pred_fallthru
        _
    $region6: #{tpu_custom_call.1} parent=1 // loop_footer
      %s19 = sadd.s32 1, %s15
    $region7: #{tpu_custom_call.1} parent=1 // loop_footer_branch
      %14 = sbr.rel target = $region3
    $region8: #{tpu_custom_call.1} parent=1 // loop_exit
      _
    %1234 = vsyncpa [#allocation3], 1
    %s1235 = scalar_lea.sflag [#allocation3], 1
    %1236 = vsyncpa %s1235, 1

</llo_original>
